<compile_context>
chip_gen: v5e
topology: v5e:2x2
jax: 0.10.0
libtpu: 0.0.40
codegen_flags: <defaults>
</compile_context>

<pallas_src>
import jax
import jax.numpy as jnp
from jax import lax
from jax.experimental import pallas as pl
from jax.experimental.pallas import tpu as pltpu

HIDDEN = 128   # nn.Linear(2*D, 128) -> ReLU -> nn.Linear(128, 1)
EB = 128       # edges packed onto the lane axis per output row


def edge_score_kernel(h_ref, w2_ref, ew_ref):
    """Per-tile: ew[j, l] = sum_k relu(h[j, l, k]) * w2[k].

    h_ref : (tile_rows, EB, HIDDEN) f32  pre-activations (x @ W1 + b1)
    w2_ref: (1, HIDDEN) f32              second-layer weights (row vector)
    ew_ref: (tile_rows, EB) f32          lane-dense per-edge scores
    """
    h = jnp.maximum(h_ref[...], 0.0)                 # ReLU (VPU)
    ew = jnp.sum(h * w2_ref[...], axis=-1)           # VPU mul + cross-lane (XLU) reduce
    ew_ref[...] = ew.astype(ew_ref.dtype)


def degree_aware_edge_scoring(edge_index, feat, params, *, tile_e=8192):
    """Returns edge_score = (edge_weight - mean) * sqrt(1e-4 / var) + 1, shape [E, 1]."""
    w1, b1, w2, b2 = params
    row, col = edge_index[0], edge_index[1]
    E = int(row.shape[0])
    D = feat.shape[1]
    feat = feat.astype(jnp.float32)

    # --- per-node projections (tiny: N x D x 128 FLOPs), b1 folded into row half ---
    hp = lax.Precision.HIGHEST
    proj_row = jnp.dot(feat, w1[:D], precision=hp) + b1        # [N, 128]
    proj_col = jnp.dot(feat, w1[D:], precision=hp)             # [N, 128]

    # --- choose tiling: edges folded onto the lane axis (n_rows x 128 edges) ---
    n_rows = (E + EB - 1) // EB
    req_rows = max(1, tile_e // EB)
    if req_rows >= n_rows:
        tile_rows = n_rows                        # single block == full array
    else:
        tile_rows = max(8, (req_rows // 8) * 8)   # keep 2nd-minor output dim 8-aligned
    n_rows_pad = ((n_rows + tile_rows - 1) // tile_rows) * tile_rows
    E_pad = n_rows_pad * EB

    # Pad the (tiny) index vectors, not the [E,128] activations: padded edges read
    # node 0 and produce garbage scores that are sliced off before the statistics.
    if E_pad != E:
        row = jnp.pad(row, (0, E_pad - E))
        col = jnp.pad(col, (0, E_pad - E))

    # --- per-edge pre-activations: the only [E,128]-sized HBM stream ---
    # TODO(synk): for embedding_dim < 64 it would be cheaper to stream the gathered
    # [E, 2D] features and run W1 on the MXU in-kernel; kept on the h_pre path for
    # parity with the real OGBN-arxiv shapes (2D >= 128).
    h_pre = proj_row[row] + proj_col[col]                      # [E_pad, 128] f32
    h3 = h_pre.reshape(n_rows_pad, EB, HIDDEN)

    grid = (n_rows_pad // tile_rows,)
    ew2d = pl.pallas_call(
        edge_score_kernel,
        out_shape=jax.ShapeDtypeStruct((n_rows_pad, EB), jnp.float32),
        grid=grid,
        in_specs=[
            pl.BlockSpec((tile_rows, EB, HIDDEN), lambda i: (i, 0, 0)),  # edge tiles
            pl.BlockSpec((1, HIDDEN), lambda i: (0, 0)),                 # w2 row (resident)
        ],
        out_specs=pl.BlockSpec((tile_rows, EB), lambda i: (i, 0)),       # lane-dense scores
        compiler_params=pltpu.CompilerParams(
            dimension_semantics=("parallel",)),
    )(h3, w2.reshape(1, HIDDEN))

    # --- tiny [E]-sized epilogue (mean / unbiased var normalization), left to XLA ---
    edge_weight = ew2d.reshape(-1)[:E] + b2[0]                 # [E]
    mean = jnp.mean(edge_weight)
    var = jnp.sum((edge_weight - mean) ** 2) / (E - 1)         # torch.var default (unbiased)
    edge_score = (edge_weight - mean) * jnp.sqrt(0.0001 / var) + 1.0
    return edge_score.reshape(-1, 1)


def reference_forward(edge_index, feat, params):
    """Pure-JAX reference mirroring the PyTorch module."""
    w1, b1, w2, b2 = params
    row, col = edge_index[0], edge_index[1]
    x = jnp.concatenate([feat[row], feat[col]], axis=1).astype(jnp.float32)
    h = jnp.maximum(jnp.dot(x, w1, precision=lax.Precision.HIGHEST) + b1, 0.0)
    ew = jnp.dot(h, w2, precision=lax.Precision.HIGHEST)[:, 0] + b2[0]
    mean = jnp.mean(ew)
    var = jnp.sum((ew - mean) ** 2) / (ew.shape[0] - 1)
    return ((ew - mean) * jnp.sqrt(0.0001 / var) + 1.0).reshape(-1, 1)


def init_params(key, embedding_dim):
    """Deterministic PyTorch-default-style init (uniform +/- 1/sqrt(fan_in))."""
    fan1 = embedding_dim * 2
    k1, k2, k3, k4 = jax.random.split(key, 4)
    bound1 = 1.0 / (fan1 ** 0.5)
    w1 = jax.random.uniform(k1, (fan1, HIDDEN), jnp.float32, -bound1, bound1)
    b1 = jax.random.uniform(k2, (HIDDEN,), jnp.float32, -bound1, bound1)
    bound2 = 1.0 / (HIDDEN ** 0.5)
    w2 = jax.random.uniform(k3, (HIDDEN, 1), jnp.float32, -bound2, bound2)
    b2 = jax.random.uniform(k4, (1,), jnp.float32, -bound2, bound2)
    return w1, b1, w2, b2


if __name__ == "__main__":
    key = jax.random.PRNGKey(0)
    D = 16   # embedding_dim
    N = 32   # number of nodes
    k_feat, k_par, k_edge = jax.random.split(key, 3)
    feat = jax.random.normal(k_feat, (N, D), jnp.float32)
    params = init_params(k_par, D)

    # Two small cases: single-block path and multi-step grid (with edge padding).
    for E, tile_e in ((300, 8192), (2500, 1024)):
        kr, kc = jax.random.split(jax.random.fold_in(k_edge, E))
        row = jax.random.randint(kr, (E,), 0, N)
        col = jax.random.randint(kc, (E,), 0, N)
        edge_index = jnp.stack([row, col])                     # [2, E] int32

        out = jax.block_until_ready(
            degree_aware_edge_scoring(edge_index, feat, params, tile_e=tile_e))
        ref = jax.block_until_ready(reference_forward(edge_index, feat, params))

        assert out.shape == (E, 1) and out.dtype == jnp.float32
        assert bool(jnp.all(jnp.isfinite(out)))
        assert bool(jnp.allclose(out, ref, atol=1e-3, rtol=1e-3)), (
            "max abs diff", float(jnp.max(jnp.abs(out - ref))))

    print("KERNEL_OK")
</pallas_src>

<mosaic_0001>
module attributes {stable_mosaic.version = 11 : i64} {
  func.func @edge_score_kernel(%arg0: i32, %arg1: memref<3x128x128xf32, #tpu.memory_space<vmem>>, %arg2: memref<1x128xf32, #tpu.memory_space<vmem>>, %arg3: memref<3x128xf32, #tpu.memory_space<vmem>>) attributes {dimension_semantics = [#tpu.dimension_semantics<parallel>], iteration_bounds = array<i64: 1>, scalar_prefetch = 0 : i64, scratch_operands = 0 : i64, tpu.core_type = #tpu.core_type<tc>, window_params = [{transform_indices = @transform_0, window_bounds = array<i64: 3, 128, 128>}, {pipeline_mode = #tpu.pipeline_mode<synchronous>, transform_indices = @transform_1, window_bounds = array<i64: 1, 128>}, {transform_indices = @transform_2, window_bounds = array<i64: 3, 128>}]} {
    %c0 = arith.constant 0 : index
    %c0_0 = arith.constant 0 : index
    %c0_1 = arith.constant 0 : index
    %0 = vector.load %arg1[%c0, %c0_0, %c0_1] : memref<3x128x128xf32, #tpu.memory_space<vmem>>, vector<3x128x128xf32>
    %cst = arith.constant 0.000000e+00 : f32
    %1 = vector.broadcast %cst : f32 to vector<3x128x128xf32>
    %2 = arith.maximumf %0, %1 : vector<3x128x128xf32>
    %c0_2 = arith.constant 0 : index
    %c0_3 = arith.constant 0 : index
    %3 = vector.load %arg2[%c0_2, %c0_3] : memref<1x128xf32, #tpu.memory_space<vmem>>, vector<1x128xf32>
    %4 = vector.shape_cast %3 : vector<1x128xf32> to vector<1x1x128xf32>
    %5 = vector.broadcast %4 : vector<1x1x128xf32> to vector<3x128x128xf32>
    %6 = arith.mulf %2, %5 : vector<3x128x128xf32>
    %cst_4 = arith.constant dense<0.000000e+00> : vector<3x128xf32>
    %7 = vector.multi_reduction <add>, %6, %cst_4 [2] : vector<3x128x128xf32> to vector<3x128xf32>
    %c0_5 = arith.constant 0 : index
    %c0_6 = arith.constant 0 : index
    %8 = vector.load %arg3[%c0_5, %c0_6] : memref<3x128xf32, #tpu.memory_space<vmem>>, vector<3x128xf32>
    tpu.vector_store %arg3[%c0_5, %c0_6], %7 {strides = array<i32>} : memref<3x128xf32, #tpu.memory_space<vmem>>, vector<3x128xf32>,
    return
  }
  func.func @transform_0(%arg0: i32) -> (i32, i32, i32) {
    %c0_i32 = arith.constant 0 : i32
    %c0_i32_0 = arith.constant 0 : i32
    %c0_i32_1 = arith.constant 0 : i32
    return %arg0, %c0_i32, %c0_i32_0 : i32, i32, i32
  }
  func.func @transform_1(%arg0: i32) -> (i32, i32) {
    %c0_i32 = arith.constant 0 : i32
    %c0_i32_0 = arith.constant 0 : i32
    %c0_i32_1 = arith.constant 0 : i32
    return %c0_i32, %c0_i32_0 : i32, i32
  }
  func.func @transform_2(%arg0: i32) -> (i32, i32) {
    %c0_i32 = arith.constant 0 : i32
    %c0_i32_0 = arith.constant 0 : i32
    return %arg0, %c0_i32 : i32, i32
  }
}

</mosaic_0001>

<llo_original>
// kernel: tpu_custom_call.1
$region0: #{tpu_custom_call.1}
  #allocation0 [shape = 'u32[]', space=smem, size = 0x4, offset = 0x4, fixed_abs, tag = 'smem constant byte address 0x4 - core index']
  #allocation1 [shape = 'u32[72,128]{1,0:T(1,128)}', space=vmem, size = 0x9000, scoped, tag = 'internal scratch']
  %s0 = inlined_call_operand.hbm [shape: f32[3,128,128], index: 0, kind: input, shape index: {}]
  %s1 = inlined_call_operand.hbm [shape: f32[1,128], index: 1, kind: input, shape index: {}]
  %s2 = inlined_call_operand.hbm [shape: f32[3,128], index: 2, kind: output, shape index: {}]
  %s3 = sld [smem:[#allocation0]]
  $region26: #{tpu_custom_call.1} parent=0
    _
  %s5 = ssub.s32 1, %s3
  %s6 = scalar_select 0, %s5, %s3
  $region1: #{tpu_custom_call.1} parent=0
    #allocation2 [shape = 'u8[196608]{0}', space=vmem, size = 0x30000, scoped, tag = 'input window, operand 0, single buffered']
    #allocation3 [shape = 's32[1]{0}', space=sflag, size = 0x4, scoped, tag = 'scoped memory for tpu_custom_call.1']
    #allocation4 [shape = 's32[1]{0}', space=sflag, size = 0x4, scoped, tag = 'scoped memory for tpu_custom_call.1']
    #allocation5 [shape = 'u8[512]{0}', space=vmem, size = 0x400, scoped, tag = 'input window, operand 1, single buffered']
    #allocation6 [shape = 's32[1]{0}', space=sflag, size = 0x4, scoped, tag = 'scoped memory for tpu_custom_call.1']
    #allocation7 [shape = 'u8[2048]{0}', space=vmem, size = 0x800, scoped, tag = 'output window, operand 0, single buffered']
    %7 = vsyncpa [#allocation3], 0
    %8 = vsyncpa [#allocation6], 0
    %9 = vsyncpa [#allocation4], 0
    // Predicated region
    $region2: #{tpu_custom_call.1} parent=1 // pred_check
      _
    $region3: #{tpu_custom_call.1} parent=1 // pred_check_branch
      %11 = sbr.rel (0) target = $region5
    $region4: #{tpu_custom_call.1} parent=1 // pred_region
      %13 = vsyncadd [#allocation3], 0
      %s14 = sshll.u32 %s0, 4
      %s15 = int_to_ptr.hbm [resolvable:$true] %s14
      %s16 = sshll.u32 [#allocation2], 4
      %s17 = int_to_ptr.vmem [resolvable:$true] %s16
      %22 = dma.hbm_to_vmem [thread:$0]  %s15, 6144, %s17, [#allocation3], 128, 128, 8
    $region5: #{tpu_custom_call.1} parent=1 // pred_fallthru
      _
    // Predicated region
    $region6: #{tpu_custom_call.1} parent=1 // pred_check
      _
    $region7: #{tpu_custom_call.1} parent=1 // pred_check_branch
      %24 = sbr.rel (0) target = $region9
    $region8: #{tpu_custom_call.1} parent=1 // pred_region
      %26 = vsyncadd [#allocation6], 0
      %s28 = sshll.u32 %s1, 4
      %s29 = int_to_ptr.hbm [resolvable:$true] %s28
      %s30 = sshll.u32 [#allocation5], 4
      %s31 = int_to_ptr.vmem [resolvable:$true] %s30
      %33 = dma.hbm_to_vmem [thread:$0]  %s29, 16, %s31, [#allocation6]
    $region9: #{tpu_custom_call.1} parent=1 // pred_fallthru
      _
    // Predicated region
    $region10: #{tpu_custom_call.1} parent=1 // pred_check
      _
    $region11: #{tpu_custom_call.1} parent=1 // pred_check_branch
      %35 = sbr.rel (0) target = $region13
    $region12: #{tpu_custom_call.1} parent=1 // pred_region
      %37 = dma.done [#allocation3], 6144
    $region13: #{tpu_custom_call.1} parent=1 // pred_fallthru
      _
    // Predicated region
    $region14: #{tpu_custom_call.1} parent=1 // pred_check
      _
    $region15: #{tpu_custom_call.1} parent=1 // pred_check_branch
      %39 = sbr.rel (0) target = $region17
    $region16: #{tpu_custom_call.1} parent=1 // pred_region
      %41 = dma.done [#allocation6], 16
    $region17: #{tpu_custom_call.1} parent=1 // pred_fallthru
      _
    %v42 = vld [vmem:[#allocation2] sm:$0xff]
    %v43 = vld [vmem:[#allocation2 + $0x8] sm:$0xff]
    %v44 = vld [vmem:[#allocation2 + $0x10] sm:$0xff]
    %v45 = vld [vmem:[#allocation2 + $0x18] sm:$0xff]
    %v46 = vld [vmem:[#allocation2 + $0x20] sm:$0xff]
    %v47 = vld [vmem:[#allocation2 + $0x28] sm:$0xff]
    %v48 = vld [vmem:[#allocation2 + $0x30] sm:$0xff]
    %v49 = vld [vmem:[#allocation2 + $0x38] sm:$0xff]
    %v50 = vld [vmem:[#allocation2 + $0x40] sm:$0xff]
    %v51 = vld [vmem:[#allocation2 + $0x48] sm:$0xff]
    %v52 = vld [vmem:[#allocation2 + $0x50] sm:$0xff]
    %v53 = vld [vmem:[#allocation2 + $0x58] sm:$0xff]
    %v54 = vld [vmem:[#allocation2 + $0x60] sm:$0xff]
    %v55 = vld [vmem:[#allocation2 + $0x68] sm:$0xff]
    %v56 = vld [vmem:[#allocation2 + $0x70] sm:$0xff]
    %v57 = vld [vmem:[#allocation2 + $0x78] sm:$0xff]
    %v58 = vld [vmem:[#allocation2 + $0x80] sm:$0xff]
    %v59 = vld [vmem:[#allocation2 + $0x88] sm:$0xff]
    %v60 = vld [vmem:[#allocation2 + $0x90] sm:$0xff]
    %v61 = vld [vmem:[#allocation2 + $0x98] sm:$0xff]
    %v62 = vld [vmem:[#allocation2 + $0xa0] sm:$0xff]
    %v63 = vld [vmem:[#allocation2 + $0xa8] sm:$0xff]
    %v64 = vld [vmem:[#allocation2 + $0xb0] sm:$0xff]
    %v65 = vld [vmem:[#allocation2 + $0xb8] sm:$0xff]
    %v66 = vld [vmem:[#allocation2 + $0xc0] sm:$0xff]
    %v67 = vld [vmem:[#allocation2 + $0xc8] sm:$0xff]
    %v68 = vld [vmem:[#allocation2 + $0xd0] sm:$0xff]
    %v69 = vld [vmem:[#allocation2 + $0xd8] sm:$0xff]
    %v70 = vld [vmem:[#allocation2 + $0xe0] sm:$0xff]
    %v71 = vld [vmem:[#allocation2 + $0xe8] sm:$0xff]
    %v72 = vld [vmem:[#allocation2 + $0xf0] sm:$0xff]
    %v73 = vld [vmem:[#allocation2 + $0xf8] sm:$0xff]
    %v74 = vld [vmem:[#allocation2 + $0x100] sm:$0xff]
    %v75 = vld [vmem:[#allocation2 + $0x108] sm:$0xff]
    %v76 = vld [vmem:[#allocation2 + $0x110] sm:$0xff]
    %v77 = vld [vmem:[#allocation2 + $0x118] sm:$0xff]
    %v78 = vld [vmem:[#allocation2 + $0x120] sm:$0xff]
    %v79 = vld [vmem:[#allocation2 + $0x128] sm:$0xff]
    %v80 = vld [vmem:[#allocation2 + $0x130] sm:$0xff]
    %v81 = vld [vmem:[#allocation2 + $0x138] sm:$0xff]
    %v82 = vld [vmem:[#allocation2 + $0x140] sm:$0xff]
    %v83 = vld [vmem:[#allocation2 + $0x148] sm:$0xff]
    %v84 = vld [vmem:[#allocation2 + $0x150] sm:$0xff]
    %v85 = vld [vmem:[#allocation2 + $0x158] sm:$0xff]
    %v86 = vld [vmem:[#allocation2 + $0x160] sm:$0xff]
    %v87 = vld [vmem:[#allocation2 + $0x168] sm:$0xff]
    %v88 = vld [vmem:[#allocation2 + $0x170] sm:$0xff]
    %v89 = vld [vmem:[#allocation2 + $0x178] sm:$0xff]
    %v90 = vmax.f32 %v42, 0.0
    %v91 = vmax.f32 %v43, 0.0
    %v92 = vmax.f32 %v44, 0.0
    %v93 = vmax.f32 %v45, 0.0
    %v94 = vmax.f32 %v46, 0.0
    %v95 = vmax.f32 %v47, 0.0
    %v96 = vmax.f32 %v48, 0.0
    %v97 = vmax.f32 %v49, 0.0
    %v98 = vmax.f32 %v50, 0.0
    %v99 = vmax.f32 %v51, 0.0
    %v100 = vmax.f32 %v52, 0.0
    %v101 = vmax.f32 %v53, 0.0
    %v102 = vmax.f32 %v54, 0.0
    %v103 = vmax.f32 %v55, 0.0
    %v104 = vmax.f32 %v56, 0.0
    %v105 = vmax.f32 %v57, 0.0
    %v106 = vmax.f32 %v58, 0.0
    %v107 = vmax.f32 %v59, 0.0
    %v108 = vmax.f32 %v60, 0.0
    %v109 = vmax.f32 %v61, 0.0
    %v110 = vmax.f32 %v62, 0.0
    %v111 = vmax.f32 %v63, 0.0
    %v112 = vmax.f32 %v64, 0.0
    %v113 = vmax.f32 %v65, 0.0
    %v114 = vmax.f32 %v66, 0.0
    %v115 = vmax.f32 %v67, 0.0
    %v116 = vmax.f32 %v68, 0.0
    %v117 = vmax.f32 %v69, 0.0
    %v118 = vmax.f32 %v70, 0.0
    %v119 = vmax.f32 %v71, 0.0
    %v120 = vmax.f32 %v72, 0.0
    %v121 = vmax.f32 %v73, 0.0
    %v122 = vmax.f32 %v74, 0.0
    %v123 = vmax.f32 %v75, 0.0
    %v124 = vmax.f32 %v76, 0.0
    %v125 = vmax.f32 %v77, 0.0
    %v126 = vmax.f32 %v78, 0.0
    %v127 = vmax.f32 %v79, 0.0
    %v128 = vmax.f32 %v80, 0.0
    %v129 = vmax.f32 %v81, 0.0
    %v130 = vmax.f32 %v82, 0.0
    %v131 = vmax.f32 %v83, 0.0
    %v132 = vmax.f32 %v84, 0.0
    %v133 = vmax.f32 %v85, 0.0
    %v134 = vmax.f32 %v86, 0.0
    %v135 = vmax.f32 %v87, 0.0
    %v136 = vmax.f32 %v88, 0.0
    %v137 = vmax.f32 %v89, 0.0
    %v138 = vld [vmem:[#allocation5] sm:$0x1]
    %v140 = vperm.slane %v138, 0
    %v142 = vmul.f32 %v90, %v140
    %v143 = vmul.f32 %v91, %v140
    %v144 = vmul.f32 %v92, %v140
    %v145 = vmul.f32 %v93, %v140
    %v146 = vmul.f32 %v94, %v140
    %v147 = vmul.f32 %v95, %v140
    %v148 = vmul.f32 %v96, %v140
    %v149 = vmul.f32 %v97, %v140
    %v150 = vmul.f32 %v98, %v140
    %v151 = vmul.f32 %v99, %v140
    %v152 = vmul.f32 %v100, %v140
    %v153 = vmul.f32 %v101, %v140
    %v154 = vmul.f32 %v102, %v140
    %v155 = vmul.f32 %v103, %v140
    %v156 = vmul.f32 %v104, %v140
    %v157 = vmul.f32 %v105, %v140
    %v158 = vmul.f32 %v106, %v140
    %v159 = vmul.f32 %v107, %v140
    %v160 = vmul.f32 %v108, %v140
    %v161 = vmul.f32 %v109, %v140
    %v162 = vmul.f32 %v110, %v140
    %v163 = vmul.f32 %v111, %v140
    %v164 = vmul.f32 %v112, %v140
    %v165 = vmul.f32 %v113, %v140
    %v166 = vmul.f32 %v114, %v140
    %v167 = vmul.f32 %v115, %v140
    %v168 = vmul.f32 %v116, %v140
    %v169 = vmul.f32 %v117, %v140
    %v170 = vmul.f32 %v118, %v140
    %v171 = vmul.f32 %v119, %v140
    %v172 = vmul.f32 %v120, %v140
    %v173 = vmul.f32 %v121, %v140
    %v174 = vmul.f32 %v122, %v140
    %v175 = vmul.f32 %v123, %v140
    %v176 = vmul.f32 %v124, %v140
    %v177 = vmul.f32 %v125, %v140
    %v178 = vmul.f32 %v126, %v140
    %v179 = vmul.f32 %v127, %v140
    %v180 = vmul.f32 %v128, %v140
    %v181 = vmul.f32 %v129, %v140
    %v182 = vmul.f32 %v130, %v140
    %v183 = vmul.f32 %v131, %v140
    %v184 = vmul.f32 %v132, %v140
    %v185 = vmul.f32 %v133, %v140
    %v186 = vmul.f32 %v134, %v140
    %v187 = vmul.f32 %v135, %v140
    %v188 = vmul.f32 %v136, %v140
    %v189 = vmul.f32 %v137, %v140
    %190 = vadd.xlane.f32.xlu0 %v142
    %v191 = vpop.xlane.xlu0 %190
    %192 = vadd.xlane.f32.xlu0 %v143
    %v193 = vpop.xlane.xlu0 %192
    %194 = vadd.xlane.f32.xlu0 %v144
    %v195 = vpop.xlane.xlu0 %194
    %196 = vadd.xlane.f32.xlu0 %v145
    %v197 = vpop.xlane.xlu0 %196
    %198 = vadd.xlane.f32.xlu0 %v146
    %v199 = vpop.xlane.xlu0 %198
    %200 = vadd.xlane.f32.xlu0 %v147
    %v201 = vpop.xlane.xlu0 %200
    %202 = vadd.xlane.f32.xlu0 %v148
    %v203 = vpop.xlane.xlu0 %202
    %204 = vadd.xlane.f32.xlu0 %v149
    %v205 = vpop.xlane.xlu0 %204
    %206 = vadd.xlane.f32.xlu0 %v150
    %v207 = vpop.xlane.xlu0 %206
    %208 = vadd.xlane.f32.xlu0 %v151
    %v209 = vpop.xlane.xlu0 %208
    %210 = vadd.xlane.f32.xlu0 %v152
    %v211 = vpop.xlane.xlu0 %210
    %212 = vadd.xlane.f32.xlu0 %v153
    %v213 = vpop.xlane.xlu0 %212
    %214 = vadd.xlane.f32.xlu0 %v154
    %v215 = vpop.xlane.xlu0 %214
    %216 = vadd.xlane.f32.xlu0 %v155
    %v217 = vpop.xlane.xlu0 %216
    %218 = vadd.xlane.f32.xlu0 %v156
    %v219 = vpop.xlane.xlu0 %218
    %220 = vadd.xlane.f32.xlu0 %v157
    %v221 = vpop.xlane.xlu0 %220
    %222 = vadd.xlane.f32.xlu0 %v158
    %v223 = vpop.xlane.xlu0 %222
    %224 = vadd.xlane.f32.xlu0 %v159
    %v225 = vpop.xlane.xlu0 %224
    %226 = vadd.xlane.f32.xlu0 %v160
    %v227 = vpop.xlane.xlu0 %226
    %228 = vadd.xlane.f32.xlu0 %v161
    %v229 = vpop.xlane.xlu0 %228
    %230 = vadd.xlane.f32.xlu0 %v162
    %v231 = vpop.xlane.xlu0 %230
    %232 = vadd.xlane.f32.xlu0 %v163
    %v233 = vpop.xlane.xlu0 %232
    %234 = vadd.xlane.f32.xlu0 %v164
    %v235 = vpop.xlane.xlu0 %234
    %236 = vadd.xlane.f32.xlu0 %v165
    %v237 = vpop.xlane.xlu0 %236
    %238 = vadd.xlane.f32.xlu0 %v166
    %v239 = vpop.xlane.xlu0 %238
    %240 = vadd.xlane.f32.xlu0 %v167
    %v241 = vpop.xlane.xlu0 %240
    %242 = vadd.xlane.f32.xlu0 %v168
    %v243 = vpop.xlane.xlu0 %242
    %244 = vadd.xlane.f32.xlu0 %v169
    %v245 = vpop.xlane.xlu0 %244
    %246 = vadd.xlane.f32.xlu0 %v170
    %v247 = vpop.xlane.xlu0 %246
    %248 = vadd.xlane.f32.xlu0 %v171
    %v249 = vpop.xlane.xlu0 %248
    %250 = vadd.xlane.f32.xlu0 %v172
    %v251 = vpop.xlane.xlu0 %250
    %252 = vadd.xlane.f32.xlu0 %v173
    %v253 = vpop.xlane.xlu0 %252
    %254 = vadd.xlane.f32.xlu0 %v174
    %v255 = vpop.xlane.xlu0 %254
    %256 = vadd.xlane.f32.xlu0 %v175
    %v257 = vpop.xlane.xlu0 %256
    %258 = vadd.xlane.f32.xlu0 %v176
    %v259 = vpop.xlane.xlu0 %258
    %260 = vadd.xlane.f32.xlu0 %v177
    %v261 = vpop.xlane.xlu0 %260
    %262 = vadd.xlane.f32.xlu0 %v178
    %v263 = vpop.xlane.xlu0 %262
    %264 = vadd.xlane.f32.xlu0 %v179
    %v265 = vpop.xlane.xlu0 %264
    %266 = vadd.xlane.f32.xlu0 %v180
    %v267 = vpop.xlane.xlu0 %266
    %268 = vadd.xlane.f32.xlu0 %v181
    %v269 = vpop.xlane.xlu0 %268
    %270 = vadd.xlane.f32.xlu0 %v182
    %v271 = vpop.xlane.xlu0 %270
    %272 = vadd.xlane.f32.xlu0 %v183
    %v273 = vpop.xlane.xlu0 %272
    %274 = vadd.xlane.f32.xlu0 %v184
    %v275 = vpop.xlane.xlu0 %274
    %276 = vadd.xlane.f32.xlu0 %v185
    %v277 = vpop.xlane.xlu0 %276
    %278 = vadd.xlane.f32.xlu0 %v186
    %v279 = vpop.xlane.xlu0 %278
    %280 = vadd.xlane.f32.xlu0 %v187
    %v281 = vpop.xlane.xlu0 %280
    %282 = vadd.xlane.f32.xlu0 %v188
    %v283 = vpop.xlane.xlu0 %282
    %284 = vadd.xlane.f32.xlu0 %v189
    %v285 = vpop.xlane.xlu0 %284
    %v334 = vlaneseq
    %v335 = vand.u32 %v334, 127
    %v336 = vperm.slane %v191, %v335
    %v337 = vadd.s32 %v335, 4294967288
    %v338 = vperm.slane %v193, %v337
    %vm339 = vcmask 130112
    %v340 = vsel %vm339, %v338, %v336
    %v341 = vadd.s32 %v335, 4294967280
    %v342 = vperm.slane %v195, %v341
    %vm343 = vcmask 195712
    %v344 = vsel %vm343, %v342, %v340
    %v345 = vadd.s32 %v335, 4294967272
    %v346 = vperm.slane %v197, %v345
    %vm347 = vcmask 261312
    %v348 = vsel %vm347, %v346, %v344
    %v349 = vadd.s32 %v335, 4294967264
    %v350 = vperm.slane %v199, %v349
    %vm351 = vcmask 326912
    %v352 = vsel %vm351, %v350, %v348
    %v353 = vadd.s32 %v335, 4294967256
    %v354 = vperm.slane %v201, %v353
    %vm355 = vcmask 392512
    %v356 = vsel %vm355, %v354, %v352
    %v357 = vadd.s32 %v335, 4294967248
    %v358 = vperm.slane %v203, %v357
    %vm359 = vcmask 458112
    %v360 = vsel %vm359, %v358, %v356
    %v361 = vadd.s32 %v335, 4294967240
    %v362 = vperm.slane %v205, %v361
    %vm363 = vcmask 523712
    %v364 = vsel %vm363, %v362, %v360
    %v365 = vadd.s32 %v335, 4294967232
    %v366 = vperm.slane %v207, %v365
    %vm367 = vcmask 589312
    %v368 = vsel %vm367, %v366, %v364
    %v369 = vadd.s32 %v335, 4294967224
    %v370 = vperm.slane %v209, %v369
    %vm371 = vcmask 654912
    %v372 = vsel %vm371, %v370, %v368
    %v373 = vadd.s32 %v335, 4294967216
    %v374 = vperm.slane %v211, %v373
    %vm375 = vcmask 720512
    %v376 = vsel %vm375, %v374, %v372
    %v377 = vadd.s32 %v335, 4294967208
    %v378 = vperm.slane %v213, %v377
    %vm379 = vcmask 786112
    %v380 = vsel %vm379, %v378, %v376
    %v381 = vadd.s32 %v335, 4294967200
    %v382 = vperm.slane %v215, %v381
    %vm383 = vcmask 851712
    %v384 = vsel %vm383, %v382, %v380
    %v385 = vadd.s32 %v335, 4294967192
    %v386 = vperm.slane %v217, %v385
    %vm387 = vcmask 917312
    %v388 = vsel %vm387, %v386, %v384
    %v389 = vadd.s32 %v335, 4294967184
    %v390 = vperm.slane %v219, %v389
    %vm391 = vcmask 982912
    %v392 = vsel %vm391, %v390, %v388
    %v393 = vadd.s32 %v335, 4294967176
    %v394 = vperm.slane %v221, %v393
    %vm395 = vcmask 1048512
    %v396 = vsel %vm395, %v394, %v392
    %v397 = vperm.slane %v223, %v335
    %v398 = vperm.slane %v225, %v337
    %v399 = vsel %vm339, %v398, %v397
    %v400 = vperm.slane %v227, %v341
    %v401 = vsel %vm343, %v400, %v399
    %v402 = vperm.slane %v229, %v345
    %v403 = vsel %vm347, %v402, %v401
    %v404 = vperm.slane %v231, %v349
    %v405 = vsel %vm351, %v404, %v403
    %v406 = vperm.slane %v233, %v353
    %v407 = vsel %vm355, %v406, %v405
    %v408 = vperm.slane %v235, %v357
    %v409 = vsel %vm359, %v408, %v407
    %v410 = vperm.slane %v237, %v361
    %v411 = vsel %vm363, %v410, %v409
    %v412 = vperm.slane %v239, %v365
    %v413 = vsel %vm367, %v412, %v411
    %v414 = vperm.slane %v241, %v369
    %v415 = vsel %vm371, %v414, %v413
    %v416 = vperm.slane %v243, %v373
    %v417 = vsel %vm375, %v416, %v415
    %v418 = vperm.slane %v245, %v377
    %v419 = vsel %vm379, %v418, %v417
    %v420 = vperm.slane %v247, %v381
    %v421 = vsel %vm383, %v420, %v419
    %v422 = vperm.slane %v249, %v385
    %v423 = vsel %vm387, %v422, %v421
    %v424 = vperm.slane %v251, %v389
    %v425 = vsel %vm391, %v424, %v423
    %v426 = vperm.slane %v253, %v393
    %v427 = vsel %vm395, %v426, %v425
    %v428 = vperm.slane %v255, %v335
    %v429 = vperm.slane %v257, %v337
    %v430 = vsel %vm339, %v429, %v428
    %v431 = vperm.slane %v259, %v341
    %v432 = vsel %vm343, %v431, %v430
    %v433 = vperm.slane %v261, %v345
    %v434 = vsel %vm347, %v433, %v432
    %v435 = vperm.slane %v263, %v349
    %v436 = vsel %vm351, %v435, %v434
    %v437 = vperm.slane %v265, %v353
    %v438 = vsel %vm355, %v437, %v436
    %v439 = vperm.slane %v267, %v357
    %v440 = vsel %vm359, %v439, %v438
    %v441 = vperm.slane %v269, %v361
    %v442 = vsel %vm363, %v441, %v440
    %v443 = vperm.slane %v271, %v365
    %v444 = vsel %vm367, %v443, %v442
    %v445 = vperm.slane %v273, %v369
    %v446 = vsel %vm371, %v445, %v444
    %v447 = vperm.slane %v275, %v373
    %v448 = vsel %vm375, %v447, %v446
    %v449 = vperm.slane %v277, %v377
    %v450 = vsel %vm379, %v449, %v448
    %v451 = vperm.slane %v279, %v381
    %v452 = vsel %vm383, %v451, %v450
    %v453 = vperm.slane %v281, %v385
    %v454 = vsel %vm387, %v453, %v452
    %v455 = vperm.slane %v283, %v389
    %v456 = vsel %vm391, %v455, %v454
    %v457 = vperm.slane %v285, %v393
    %v458 = vsel %vm395, %v457, %v456
    %vm459 = vcmask 1041409
    %v460 = vsel %vm459, %v427, %v396
    %vm461 = vcmask 1042434
    %v462 = vsel %vm461, %v458, %v460
    %464 = vst [vmem:[#allocation7] sm:$0x7] %v462
    // Predicated region
    $region18: #{tpu_custom_call.1} parent=1 // pred_check
      _
    $region19: #{tpu_custom_call.1} parent=1 // pred_check_branch
      %466 = sbr.rel (0) target = $region21
    $region20: #{tpu_custom_call.1} parent=1 // pred_region
      %468 = vsyncadd [#allocation4], 0
      %s470 = sshll.u32 [#allocation7], 4
      %s471 = int_to_ptr.vmem [resolvable:$true] %s470
      %s472 = sshll.u32 %s2, 4
      %s473 = int_to_ptr.hbm [resolvable:$true] %s472
      %475 = dma.vmem_to_hbm [thread:$0]  %s471, 64, %s473, [#allocation4]
    $region21: #{tpu_custom_call.1} parent=1 // pred_fallthru
      _
    // Predicated region
    $region22: #{tpu_custom_call.1} parent=1 // pred_check
      _
    $region23: #{tpu_custom_call.1} parent=1 // pred_check_branch
      %477 = sbr.rel (0) target = $region25
    $region24: #{tpu_custom_call.1} parent=1 // pred_region
      %479 = dma.done [#allocation4], 64
    $region25: #{tpu_custom_call.1} parent=1 // pred_fallthru
      _
    %480 = vsyncpa [#allocation3], 1
    %481 = vsyncpa [#allocation6], 1
    %482 = vsyncpa [#allocation4], 1

</llo_original>
